<compile_context>
chip_gen: v5e
topology: v5e:2x2
jax: 0.10.0
libtpu: 0.0.40
codegen_flags: <defaults>
</compile_context>

<pallas_src>
import functools

import jax
import jax.numpy as jnp
from jax import lax
from jax.experimental import pallas as pl
from jax.experimental.pallas import tpu as pltpu


def _vae_kernel(
    x_ref,
    wqkv_ref, bqkv_ref,
    w1_ref, b1_ref, g1_ref, beta1_ref,
    w2_ref, b2_ref, g2_ref, beta2_ref,
    whead_ref,
    muls_ref, kl_ref,
    *, scale: float, emb: int, num_topics: int,
):
    f32 = jnp.float32
    x = x_ref[...]

    # ---- SelfAttention: fused QKV projection (single lane-dense matmul) ----
    qkv = jnp.dot(x, wqkv_ref[...], preferred_element_type=f32) + bqkv_ref[...]
    q = qkv[:, :emb]
    k = qkv[:, emb:2 * emb]
    v = qkv[:, 2 * emb:]

    # scores = q @ k^T, contracting last axes directly (no materialized k.T).
    scores = lax.dot_general(q, k, (((1,), (1,)), ((), ())),
                             preferred_element_type=f32) * scale
    scores = scores - jnp.max(scores, axis=-1, keepdims=True)
    e = jnp.exp(scores)
    attn = e * pl.reciprocal(jnp.sum(e, axis=-1, keepdims=True), approx=True)
    residual = jnp.dot(attn, v, preferred_element_type=f32)

    # ---- ResidualBlock: Linear -> LayerNorm -> LeakyReLU (-> Dropout=id) ---
    def res_block(inp, w, b, gamma, beta, res):
        y = jnp.dot(inp, w, preferred_element_type=f32) + b
        mean = jnp.mean(y, axis=-1, keepdims=True)
        var = jnp.mean((y - mean) * (y - mean), axis=-1, keepdims=True)
        yn = (y - mean) * lax.rsqrt(var + 1e-5)      # EUP rsqrt
        yn = yn * gamma + beta
        yn = jnp.where(yn >= 0, yn, 0.01 * yn)       # LeakyReLU(0.01)
        return yn + res

    # residual_block1(x, residual)
    h = res_block(x, w1_ref[...], b1_ref[...], g1_ref[...], beta1_ref[...],
                  residual)
    # blocks[0](h, residual); residual = h  (block_num = 1)
    h = res_block(h, w2_ref[...], b2_ref[...], g2_ref[...], beta2_ref[...],
                  residual)

    # ---- fused heads (mu | log_sigma), single lane-denser output -----------
    head = jnp.dot(h, whead_ref[...], preferred_element_type=f32)   # [B, 2T]
    muls_ref[...] = head

    mu = head[:, :num_topics]
    ls = head[:, num_topics:]

    # ---- KL term (scalar -> SMEM output, no padded VMEM tile) --------------
    kl_per_row = -0.5 * jnp.sum(1.0 + ls - mu * mu - jnp.exp(ls),
                                axis=-1, keepdims=True)              # (B, 1)
    kl_ref[0, 0] = jnp.sum(kl_per_row) / jnp.float32(kl_per_row.shape[0])


def vae_forward(x, params):
    """x: [B, input_dim] f32. params: dict of f32 arrays (see init below)."""
    B = x.shape[0]
    E = params["wq"].shape[1]
    T = params["wmu"].shape[1]
    scale = float(E) ** (-0.5)

    # Fuse QKV and the two heads into lane-dense weights (wrapper-side).
    wqkv = jnp.concatenate([params["wq"], params["wk"], params["wv"]], axis=1)
    bqkv = jnp.concatenate([params["bq"], params["bk"], params["bv"]], axis=1)
    whead = jnp.concatenate([params["wmu"], params["wls"]], axis=1)

    vmem = pl.BlockSpec(memory_space=pltpu.MemorySpace.VMEM)
    smem = pl.BlockSpec(memory_space=pltpu.MemorySpace.SMEM)

    args = (
        x, wqkv, bqkv,
        params["w1"], params["b1"], params["g1"], params["beta1"],
        params["w2"], params["b2"], params["g2"], params["beta2"],
        whead,
    )

    muls, kl = pl.pallas_call(
        functools.partial(_vae_kernel, scale=scale, emb=E, num_topics=T),
        out_shape=(
            jax.ShapeDtypeStruct((B, 2 * T), jnp.float32),
            jax.ShapeDtypeStruct((1, 1), jnp.float32),
        ),
        in_specs=[vmem] * len(args),
        out_specs=(vmem, smem),
    )(*args)
    return muls[:, :T], muls[:, T:], kl[0, 0]


def init_params(key, input_dim, emb_size, num_topics):
    """Deterministic synthetic params. Weights stored as (in, out)."""
    ks = jax.random.split(key, 12)
    n = lambda k, shp, s=0.1: (s * jax.random.normal(k, shp)).astype(jnp.float32)
    return {
        # attention
        "wq": n(ks[0], (input_dim, emb_size)), "bq": n(ks[1], (1, emb_size)),
        "wk": n(ks[2], (input_dim, emb_size)), "bk": n(ks[3], (1, emb_size)),
        "wv": n(ks[4], (input_dim, emb_size)), "bv": n(ks[5], (1, emb_size)),
        # residual_block1: Linear(input_dim, emb) + LayerNorm(emb)
        "w1": n(ks[6], (input_dim, emb_size)), "b1": n(ks[7], (1, emb_size)),
        "g1": jnp.ones((1, emb_size), jnp.float32),
        "beta1": jnp.zeros((1, emb_size), jnp.float32),
        # blocks[0]: Linear(emb, emb) + LayerNorm(emb)
        "w2": n(ks[8], (emb_size, emb_size)), "b2": n(ks[9], (1, emb_size)),
        "g2": jnp.ones((1, emb_size), jnp.float32),
        "beta2": jnp.zeros((1, emb_size), jnp.float32),
        # heads (bias=False)
        "wmu": n(ks[10], (emb_size, num_topics)),
        "wls": n(ks[11], (emb_size, num_topics)),
    }


def vae_reference(x, params, scale):
    """Pure-JAX reference for validation."""
    q = x @ params["wq"] + params["bq"]
    k = x @ params["wk"] + params["bk"]
    v = x @ params["wv"] + params["bv"]
    attn = jax.nn.softmax((q @ k.T) * scale, axis=-1)
    residual = attn @ v

    def block(inp, w, b, g, beta, res):
        y = inp @ w + b
        mean = jnp.mean(y, -1, keepdims=True)
        var = jnp.mean((y - mean) ** 2, -1, keepdims=True)
        yn = (y - mean) / jnp.sqrt(var + 1e-5) * g + beta
        yn = jnp.where(yn >= 0, yn, 0.01 * yn)
        return yn + res

    h = block(x, params["w1"], params["b1"], params["g1"], params["beta1"],
              residual)
    h = block(h, params["w2"], params["b2"], params["g2"], params["beta2"],
              residual)
    mu = h @ params["wmu"]
    ls = h @ params["wls"]
    kl = -0.5 * jnp.sum(1 + ls - mu ** 2 - jnp.exp(ls), axis=-1)
    return mu, ls, jnp.mean(kl)


if __name__ == "__main__":
    B, INPUT_DIM, EMB, TOPICS = 8, 32, 32, 16

    key = jax.random.PRNGKey(0)
    kx, kp = jax.random.split(key)
    x = jax.random.normal(kx, (B, INPUT_DIM), dtype=jnp.float32)
    params = init_params(kp, INPUT_DIM, EMB, TOPICS)

    mu, log_sigma, kl = jax.block_until_ready(vae_forward(x, params))

    mu_r, ls_r, kl_r = vae_reference(x, params, float(EMB) ** (-0.5))
    assert mu.shape == (B, TOPICS) and log_sigma.shape == (B, TOPICS)
    # Tolerances widened slightly: approx=True reciprocal in the softmax
    # introduces ~1e-3-relative error in the normalization.
    assert jnp.allclose(mu, mu_r, atol=5e-3, rtol=5e-3)
    assert jnp.allclose(log_sigma, ls_r, atol=5e-3, rtol=5e-3)
    assert jnp.allclose(kl, kl_r, atol=1e-2, rtol=1e-2)

    print("KERNEL_OK")
</pallas_src>

<mosaic_0001>
module attributes {stable_mosaic.version = 11 : i64} {
  func.func @_vae_kernel(%arg0: memref<8x32xf32, #tpu.memory_space<vmem>>, %arg1: memref<32x96xf32, #tpu.memory_space<vmem>>, %arg2: memref<1x96xf32, #tpu.memory_space<vmem>>, %arg3: memref<32x32xf32, #tpu.memory_space<vmem>>, %arg4: memref<1x32xf32, #tpu.memory_space<vmem>>, %arg5: memref<1x32xf32, #tpu.memory_space<vmem>>, %arg6: memref<1x32xf32, #tpu.memory_space<vmem>>, %arg7: memref<32x32xf32, #tpu.memory_space<vmem>>, %arg8: memref<1x32xf32, #tpu.memory_space<vmem>>, %arg9: memref<1x32xf32, #tpu.memory_space<vmem>>, %arg10: memref<1x32xf32, #tpu.memory_space<vmem>>, %arg11: memref<32x32xf32, #tpu.memory_space<vmem>>, %arg12: memref<8x32xf32, #tpu.memory_space<vmem>>, %arg13: memref<1x1xf32, #tpu.memory_space<smem>>) attributes {dimension_semantics = [], scalar_prefetch = 0 : i64, scratch_operands = 0 : i64, tpu.core_type = #tpu.core_type<tc>} {
    %c0 = arith.constant 0 : index
    %c0_0 = arith.constant 0 : index
    %0 = vector.load %arg0[%c0, %c0_0] : memref<8x32xf32, #tpu.memory_space<vmem>>, vector<8x32xf32>
    %c0_1 = arith.constant 0 : index
    %c0_2 = arith.constant 0 : index
    %1 = vector.load %arg1[%c0_1, %c0_2] : memref<32x96xf32, #tpu.memory_space<vmem>>, vector<32x96xf32>
    %cst = arith.constant dense<0.000000e+00> : vector<8x96xf32>
    %2 = tpu.matmul %0, %1, %cst {dimension_numbers = #tpu.dot_dimension_numbers<[1], [0], [0], [1], [0, 0, 1, 1], [], []>} : vector<8x32xf32>, vector<32x96xf32>, vector<8x96xf32> -> vector<8x96xf32>
    %c0_3 = arith.constant 0 : index
    %c0_4 = arith.constant 0 : index
    %3 = vector.load %arg2[%c0_3, %c0_4] : memref<1x96xf32, #tpu.memory_space<vmem>>, vector<1x96xf32>
    %4 = vector.broadcast %3 : vector<1x96xf32> to vector<8x96xf32>
    %5 = arith.addf %2, %4 : vector<8x96xf32>
    %6 = vector.extract_strided_slice %5 {offsets = [0, 0], sizes = [8, 32], strides = [1, 1]} : vector<8x96xf32> to vector<8x32xf32>
    %7 = vector.extract_strided_slice %5 {offsets = [0, 32], sizes = [8, 32], strides = [1, 1]} : vector<8x96xf32> to vector<8x32xf32>
    %8 = vector.extract_strided_slice %5 {offsets = [0, 64], sizes = [8, 32], strides = [1, 1]} : vector<8x96xf32> to vector<8x32xf32>
    %cst_5 = arith.constant dense<0.000000e+00> : vector<8x8xf32>
    %9 = tpu.matmul %6, %7, %cst_5 {dimension_numbers = #tpu.dot_dimension_numbers<[1], [1], [0], [0], [0, 0, 1, 0], [], []>} : vector<8x32xf32>, vector<8x32xf32>, vector<8x8xf32> -> vector<8x8xf32>
    %cst_6 = arith.constant 0.176776692 : f32
    %10 = vector.broadcast %cst_6 : f32 to vector<8x8xf32>
    %11 = arith.mulf %9, %10 : vector<8x8xf32>
    %cst_7 = arith.constant dense<0xFF800000> : vector<8xf32>
    %12 = vector.multi_reduction <maximumf>, %11, %cst_7 [1] : vector<8x8xf32> to vector<8xf32>
    %13 = vector.shape_cast %12 : vector<8xf32> to vector<8x1xf32>
    %14 = vector.broadcast %13 : vector<8x1xf32> to vector<8x8xf32>
    %15 = arith.subf %11, %14 : vector<8x8xf32>
    %16 = math.exp %15 : vector<8x8xf32>
    %cst_8 = arith.constant dense<0.000000e+00> : vector<8xf32>
    %17 = vector.multi_reduction <add>, %16, %cst_8 [1] : vector<8x8xf32> to vector<8xf32>
    %18 = vector.shape_cast %17 : vector<8xf32> to vector<8x1xf32>
    %19 = tpu.reciprocal %18 {approx = true} : vector<8x1xf32> -> vector<8x1xf32>
    %20 = vector.broadcast %19 : vector<8x1xf32> to vector<8x8xf32>
    %21 = arith.mulf %16, %20 : vector<8x8xf32>
    %cst_9 = arith.constant dense<0.000000e+00> : vector<8x32xf32>
    %22 = tpu.matmul %21, %8, %cst_9 {dimension_numbers = #tpu.dot_dimension_numbers<[1], [0], [0], [1], [0, 0, 1, 1], [], []>} : vector<8x8xf32>, vector<8x32xf32>, vector<8x32xf32> -> vector<8x32xf32>
    %c0_10 = arith.constant 0 : index
    %c0_11 = arith.constant 0 : index
    %23 = vector.load %arg3[%c0_10, %c0_11] : memref<32x32xf32, #tpu.memory_space<vmem>>, vector<32x32xf32>
    %c0_12 = arith.constant 0 : index
    %c0_13 = arith.constant 0 : index
    %24 = vector.load %arg4[%c0_12, %c0_13] : memref<1x32xf32, #tpu.memory_space<vmem>>, vector<1x32xf32>
    %c0_14 = arith.constant 0 : index
    %c0_15 = arith.constant 0 : index
    %25 = vector.load %arg5[%c0_14, %c0_15] : memref<1x32xf32, #tpu.memory_space<vmem>>, vector<1x32xf32>
    %c0_16 = arith.constant 0 : index
    %c0_17 = arith.constant 0 : index
    %26 = vector.load %arg6[%c0_16, %c0_17] : memref<1x32xf32, #tpu.memory_space<vmem>>, vector<1x32xf32>
    %cst_18 = arith.constant dense<0.000000e+00> : vector<8x32xf32>
    %27 = tpu.matmul %0, %23, %cst_18 {dimension_numbers = #tpu.dot_dimension_numbers<[1], [0], [0], [1], [0, 0, 1, 1], [], []>} : vector<8x32xf32>, vector<32x32xf32>, vector<8x32xf32> -> vector<8x32xf32>
    %28 = vector.broadcast %24 : vector<1x32xf32> to vector<8x32xf32>
    %29 = arith.addf %27, %28 : vector<8x32xf32>
    %cst_19 = arith.constant dense<0.000000e+00> : vector<8xf32>
    %30 = vector.multi_reduction <add>, %29, %cst_19 [1] : vector<8x32xf32> to vector<8xf32>
    %31 = vector.shape_cast %30 : vector<8xf32> to vector<8x1xf32>
    %cst_20 = arith.constant 3.200000e+01 : f32
    %32 = vector.broadcast %cst_20 : f32 to vector<8x1xf32>
    %33 = arith.divf %31, %32 : vector<8x1xf32>
    %34 = vector.broadcast %33 : vector<8x1xf32> to vector<8x32xf32>
    %35 = arith.subf %29, %34 : vector<8x32xf32>
    %36 = vector.broadcast %33 : vector<8x1xf32> to vector<8x32xf32>
    %37 = arith.subf %29, %36 : vector<8x32xf32>
    %38 = arith.mulf %35, %37 : vector<8x32xf32>
    %cst_21 = arith.constant dense<0.000000e+00> : vector<8xf32>
    %39 = vector.multi_reduction <add>, %38, %cst_21 [1] : vector<8x32xf32> to vector<8xf32>
    %40 = vector.shape_cast %39 : vector<8xf32> to vector<8x1xf32>
    %cst_22 = arith.constant 3.200000e+01 : f32
    %41 = vector.broadcast %cst_22 : f32 to vector<8x1xf32>
    %42 = arith.divf %40, %41 : vector<8x1xf32>
    %43 = vector.broadcast %33 : vector<8x1xf32> to vector<8x32xf32>
    %44 = arith.subf %29, %43 : vector<8x32xf32>
    %cst_23 = arith.constant 9.99999974E-6 : f32
    %45 = vector.broadcast %cst_23 : f32 to vector<8x1xf32>
    %46 = arith.addf %42, %45 : vector<8x1xf32>
    %47 = math.rsqrt %46 : vector<8x1xf32>
    %48 = vector.broadcast %47 : vector<8x1xf32> to vector<8x32xf32>
    %49 = arith.mulf %44, %48 : vector<8x32xf32>
    %50 = vector.broadcast %25 : vector<1x32xf32> to vector<8x32xf32>
    %51 = arith.mulf %49, %50 : vector<8x32xf32>
    %52 = vector.broadcast %26 : vector<1x32xf32> to vector<8x32xf32>
    %53 = arith.addf %51, %52 : vector<8x32xf32>
    %cst_24 = arith.constant 0.000000e+00 : f32
    %54 = vector.broadcast %cst_24 : f32 to vector<8x32xf32>
    %55 = arith.cmpf oge, %53, %54 : vector<8x32xf32>
    %cst_25 = arith.constant 0.00999999977 : f32
    %56 = vector.broadcast %cst_25 : f32 to vector<8x32xf32>
    %57 = arith.mulf %56, %53 : vector<8x32xf32>
    %58 = arith.select %55, %53, %57 : vector<8x32xi1>, vector<8x32xf32>
    %59 = arith.addf %58, %22 : vector<8x32xf32>
    %c0_26 = arith.constant 0 : index
    %c0_27 = arith.constant 0 : index
    %60 = vector.load %arg7[%c0_26, %c0_27] : memref<32x32xf32, #tpu.memory_space<vmem>>, vector<32x32xf32>
    %c0_28 = arith.constant 0 : index
    %c0_29 = arith.constant 0 : index
    %61 = vector.load %arg8[%c0_28, %c0_29] : memref<1x32xf32, #tpu.memory_space<vmem>>, vector<1x32xf32>
    %c0_30 = arith.constant 0 : index
    %c0_31 = arith.constant 0 : index
    %62 = vector.load %arg9[%c0_30, %c0_31] : memref<1x32xf32, #tpu.memory_space<vmem>>, vector<1x32xf32>
    %c0_32 = arith.constant 0 : index
    %c0_33 = arith.constant 0 : index
    %63 = vector.load %arg10[%c0_32, %c0_33] : memref<1x32xf32, #tpu.memory_space<vmem>>, vector<1x32xf32>
    %cst_34 = arith.constant dense<0.000000e+00> : vector<8x32xf32>
    %64 = tpu.matmul %59, %60, %cst_34 {dimension_numbers = #tpu.dot_dimension_numbers<[1], [0], [0], [1], [0, 0, 1, 1], [], []>} : vector<8x32xf32>, vector<32x32xf32>, vector<8x32xf32> -> vector<8x32xf32>
    %65 = vector.broadcast %61 : vector<1x32xf32> to vector<8x32xf32>
    %66 = arith.addf %64, %65 : vector<8x32xf32>
    %cst_35 = arith.constant dense<0.000000e+00> : vector<8xf32>
    %67 = vector.multi_reduction <add>, %66, %cst_35 [1] : vector<8x32xf32> to vector<8xf32>
    %68 = vector.shape_cast %67 : vector<8xf32> to vector<8x1xf32>
    %cst_36 = arith.constant 3.200000e+01 : f32
    %69 = vector.broadcast %cst_36 : f32 to vector<8x1xf32>
    %70 = arith.divf %68, %69 : vector<8x1xf32>
    %71 = vector.broadcast %70 : vector<8x1xf32> to vector<8x32xf32>
    %72 = arith.subf %66, %71 : vector<8x32xf32>
    %73 = vector.broadcast %70 : vector<8x1xf32> to vector<8x32xf32>
    %74 = arith.subf %66, %73 : vector<8x32xf32>
    %75 = arith.mulf %72, %74 : vector<8x32xf32>
    %cst_37 = arith.constant dense<0.000000e+00> : vector<8xf32>
    %76 = vector.multi_reduction <add>, %75, %cst_37 [1] : vector<8x32xf32> to vector<8xf32>
    %77 = vector.shape_cast %76 : vector<8xf32> to vector<8x1xf32>
    %cst_38 = arith.constant 3.200000e+01 : f32
    %78 = vector.broadcast %cst_38 : f32 to vector<8x1xf32>
    %79 = arith.divf %77, %78 : vector<8x1xf32>
    %80 = vector.broadcast %70 : vector<8x1xf32> to vector<8x32xf32>
    %81 = arith.subf %66, %80 : vector<8x32xf32>
    %cst_39 = arith.constant 9.99999974E-6 : f32
    %82 = vector.broadcast %cst_39 : f32 to vector<8x1xf32>
    %83 = arith.addf %79, %82 : vector<8x1xf32>
    %84 = math.rsqrt %83 : vector<8x1xf32>
    %85 = vector.broadcast %84 : vector<8x1xf32> to vector<8x32xf32>
    %86 = arith.mulf %81, %85 : vector<8x32xf32>
    %87 = vector.broadcast %62 : vector<1x32xf32> to vector<8x32xf32>
    %88 = arith.mulf %86, %87 : vector<8x32xf32>
    %89 = vector.broadcast %63 : vector<1x32xf32> to vector<8x32xf32>
    %90 = arith.addf %88, %89 : vector<8x32xf32>
    %cst_40 = arith.constant 0.000000e+00 : f32
    %91 = vector.broadcast %cst_40 : f32 to vector<8x32xf32>
    %92 = arith.cmpf oge, %90, %91 : vector<8x32xf32>
    %cst_41 = arith.constant 0.00999999977 : f32
    %93 = vector.broadcast %cst_41 : f32 to vector<8x32xf32>
    %94 = arith.mulf %93, %90 : vector<8x32xf32>
    %95 = arith.select %92, %90, %94 : vector<8x32xi1>, vector<8x32xf32>
    %96 = arith.addf %95, %22 : vector<8x32xf32>
    %c0_42 = arith.constant 0 : index
    %c0_43 = arith.constant 0 : index
    %97 = vector.load %arg11[%c0_42, %c0_43] : memref<32x32xf32, #tpu.memory_space<vmem>>, vector<32x32xf32>
    %cst_44 = arith.constant dense<0.000000e+00> : vector<8x32xf32>
    %98 = tpu.matmul %96, %97, %cst_44 {dimension_numbers = #tpu.dot_dimension_numbers<[1], [0], [0], [1], [0, 0, 1, 1], [], []>} : vector<8x32xf32>, vector<32x32xf32>, vector<8x32xf32> -> vector<8x32xf32>
    %c0_45 = arith.constant 0 : index
    %c0_46 = arith.constant 0 : index
    %99 = vector.load %arg12[%c0_45, %c0_46] : memref<8x32xf32, #tpu.memory_space<vmem>>, vector<8x32xf32>
    tpu.vector_store %arg12[%c0_45, %c0_46], %98 {strides = array<i32>} : memref<8x32xf32, #tpu.memory_space<vmem>>, vector<8x32xf32>,
    %100 = vector.extract_strided_slice %98 {offsets = [0, 0], sizes = [8, 16], strides = [1, 1]} : vector<8x32xf32> to vector<8x16xf32>
    %101 = vector.extract_strided_slice %98 {offsets = [0, 16], sizes = [8, 16], strides = [1, 1]} : vector<8x32xf32> to vector<8x16xf32>
    %cst_47 = arith.constant 1.000000e+00 : f32
    %102 = vector.broadcast %cst_47 : f32 to vector<8x16xf32>
    %103 = arith.addf %102, %101 : vector<8x16xf32>
    %104 = arith.mulf %100, %100 : vector<8x16xf32>
    %105 = arith.subf %103, %104 : vector<8x16xf32>
    %106 = math.exp %101 : vector<8x16xf32>
    %107 = arith.subf %105, %106 : vector<8x16xf32>
    %cst_48 = arith.constant dense<0.000000e+00> : vector<8xf32>
    %108 = vector.multi_reduction <add>, %107, %cst_48 [1] : vector<8x16xf32> to vector<8xf32>
    %109 = vector.shape_cast %108 : vector<8xf32> to vector<8x1xf32>
    %cst_49 = arith.constant -5.000000e-01 : f32
    %110 = vector.broadcast %cst_49 : f32 to vector<8x1xf32>
    %111 = arith.mulf %110, %109 : vector<8x1xf32>
    %112 = vector.shape_cast %111 : vector<8x1xf32> to vector<1x8x1xf32>
    %cst_50 = arith.constant dense<0.000000e+00> : vector<1xf32>
    %113 = vector.multi_reduction <add>, %112, %cst_50 [1, 2] : vector<1x8x1xf32> to vector<1xf32>
    %114 = vector.shape_cast %113 : vector<1xf32> to vector<1x1x1xf32>
    %115 = vector.extract %114[0, 0, 0] : f32 from vector<1x1x1xf32>
    %cst_51 = arith.constant 8.000000e+00 : f32
    %116 = arith.divf %115, %cst_51 : f32
    %c0_52 = arith.constant 0 : index
    %c0_53 = arith.constant 0 : index
    %117 = memref.load %arg13[%c0_52, %c0_53] : memref<1x1xf32, #tpu.memory_space<smem>>
    memref.store %116, %arg13[%c0_52, %c0_53] : memref<1x1xf32, #tpu.memory_space<smem>>
    return
  }
}

</mosaic_0001>

<llo_original>
// kernel: tpu_custom_call.1
$region0: #{tpu_custom_call.1}
  #allocation0 [shape = 'u32[]', space=smem, size = 0x4, offset = 0x4, fixed_abs, tag = 'smem constant byte address 0x4 - core index']
  #allocation1 [shape = 'u32[72,128]{1,0:T(1,128)}', space=vmem, size = 0x9000, scoped, tag = 'internal scratch']
  %s0 = inlined_call_operand.hbm [shape: f32[8,32], index: 0, kind: input, shape index: {}]
  %s1 = inlined_call_operand.hbm [shape: f32[32,96], index: 1, kind: input, shape index: {}]
  %s2 = inlined_call_operand.vmem [shape: f32[1,96], index: 2, kind: input, shape index: {}]
  %s3 = inlined_call_operand.hbm [shape: f32[32,32], index: 3, kind: input, shape index: {}]
  %s4 = inlined_call_operand.vmem [shape: f32[1,32], index: 4, kind: input, shape index: {}]
  %s5 = inlined_call_operand.vmem [shape: f32[1,32], index: 5, kind: input, shape index: {}]
  %s6 = inlined_call_operand.vmem [shape: f32[1,32], index: 6, kind: input, shape index: {}]
  %s7 = inlined_call_operand.hbm [shape: f32[32,32], index: 7, kind: input, shape index: {}]
  %s8 = inlined_call_operand.vmem [shape: f32[1,32], index: 8, kind: input, shape index: {}]
  %s9 = inlined_call_operand.vmem [shape: f32[1,32], index: 9, kind: input, shape index: {}]
  %s10 = inlined_call_operand.vmem [shape: f32[1,32], index: 10, kind: input, shape index: {}]
  %s11 = inlined_call_operand.hbm [shape: f32[32,32], index: 11, kind: input, shape index: {}]
  %s12 = inlined_call_operand.hbm [shape: f32[8,32], index: 12, kind: output, shape index: {0}]
  %s13 = inlined_call_operand.hbm [shape: f32[1,1], index: 13, kind: output, shape index: {1}]
  %14 = xla_tuple %s12, %s13
  %s15 = sld [smem:[#allocation0]]
  $region86: #{tpu_custom_call.1} parent=0
    _
  %s17 = ssub.s32 1, %s15
  %s18 = scalar_select 0, %s17, %s15
  $region1: #{tpu_custom_call.1} parent=0
    #allocation2 [shape = 'u8[4096]{0}', space=vmem, size = 0x1000, scoped, tag = 'input window, operand 0, single buffered']
    #allocation3 [shape = 's32[1]{0}', space=sflag, size = 0x4, scoped, tag = 'scoped memory for tpu_custom_call.1']
    #allocation4 [shape = 's32[1]{0}', space=sflag, size = 0x4, scoped, tag = 'scoped memory for tpu_custom_call.1']
    #allocation5 [shape = 's32[1]{0}', space=sflag, size = 0x4, scoped, tag = 'scoped memory for tpu_custom_call.1']
    #allocation6 [shape = 'u8[16384]{0}', space=vmem, size = 0x4000, scoped, tag = 'input window, operand 1, single buffered']
    #allocation7 [shape = 's32[1]{0}', space=sflag, size = 0x4, scoped, tag = 'scoped memory for tpu_custom_call.1']
    #allocation8 [shape = 'u8[16384]{0}', space=vmem, size = 0x4000, scoped, tag = 'input window, operand 3, single buffered']
    #allocation9 [shape = 'u8[16384]{0}', space=vmem, size = 0x4000, scoped, tag = 'input window, operand 7, single buffered']
    #allocation10 [shape = 's32[1]{0}', space=sflag, size = 0x4, scoped, tag = 'scoped memory for tpu_custom_call.1']
    #allocation11 [shape = 'u8[16384]{0}', space=vmem, size = 0x4000, scoped, tag = 'input window, operand 11, single buffered']
    #allocation12 [shape = 'u8[4096]{0}', space=vmem, size = 0x1000, scoped, tag = 'output window, operand 0, single buffered']
    #allocation13 [shape = 'u8[512]{0}', space=smem, size = 0x200, scoped, tag = 'output window, operand 1, single buffered']
    %19 = vsyncpa [#allocation3], 0
    %20 = vsyncpa [#allocation7], 0
    %21 = vsyncpa [#allocation10], 0
    %22 = vsyncpa [#allocation4], 0
    %23 = vsyncpa [#allocation5], 0
    // Predicated region
    $region2: #{tpu_custom_call.1} parent=1 // pred_check
      _
    $region3: #{tpu_custom_call.1} parent=1 // pred_check_branch
      %25 = sbr.rel (0) target = $region5
    $region4: #{tpu_custom_call.1} parent=1 // pred_region
      %27 = vsyncadd [#allocation3], 0
      %s29 = sshll.u32 %s0, 4
      %s30 = int_to_ptr.hbm [resolvable:$true] %s29
      %s31 = sshll.u32 [#allocation2], 4
      %s32 = int_to_ptr.vmem [resolvable:$true] %s31
      %34 = dma.hbm_to_vmem [thread:$0]  %s30, 128, %s32, [#allocation3]
    $region5: #{tpu_custom_call.1} parent=1 // pred_fallthru
      _
    // Predicated region
    $region6: #{tpu_custom_call.1} parent=1 // pred_check
      _
    $region7: #{tpu_custom_call.1} parent=1 // pred_check_branch
      %36 = sbr.rel (0) target = $region9
    $region8: #{tpu_custom_call.1} parent=1 // pred_region
      %38 = vsyncadd [#allocation7], 0
      %s39 = sshll.u32 %s1, 4
      %s40 = int_to_ptr.hbm [resolvable:$true] %s39
      %s41 = sshll.u32 [#allocation6], 4
      %s42 = int_to_ptr.vmem [resolvable:$true] %s41
      %47 = dma.hbm_to_vmem [thread:$0]  %s40, 512, %s42, [#allocation7], 128, 128, 8
    $region9: #{tpu_custom_call.1} parent=1 // pred_fallthru
      _
    // Predicated region
    $region10: #{tpu_custom_call.1} parent=1 // pred_check
      _
    $region11: #{tpu_custom_call.1} parent=1 // pred_check_branch
      %49 = sbr.rel (0) target = $region13
    $region12: #{tpu_custom_call.1} parent=1 // pred_region
      _
    $region13: #{tpu_custom_call.1} parent=1 // pred_fallthru
      _
    // Predicated region
    $region14: #{tpu_custom_call.1} parent=1 // pred_check
      _
    $region15: #{tpu_custom_call.1} parent=1 // pred_check_branch
      %51 = sbr.rel (0) target = $region17
    $region16: #{tpu_custom_call.1} parent=1 // pred_region
      %53 = vsyncadd [#allocation7], 0
      %s54 = sshll.u32 %s3, 4
      %s55 = int_to_ptr.hbm [resolvable:$true] %s54
      %s56 = sshll.u32 [#allocation8], 4
      %s57 = int_to_ptr.vmem [resolvable:$true] %s56
      %62 = dma.hbm_to_vmem [thread:$0]  %s55, 512, %s57, [#allocation7], 128, 128, 8
    $region17: #{tpu_custom_call.1} parent=1 // pred_fallthru
      _
    // Predicated region
    $region18: #{tpu_custom_call.1} parent=1 // pred_check
      _
    $region19: #{tpu_custom_call.1} parent=1 // pred_check_branch
      %64 = sbr.rel (0) target = $region21
    $region20: #{tpu_custom_call.1} parent=1 // pred_region
      _
    $region21: #{tpu_custom_call.1} parent=1 // pred_fallthru
      _
    // Predicated region
    $region22: #{tpu_custom_call.1} parent=1 // pred_check
      _
    $region23: #{tpu_custom_call.1} parent=1 // pred_check_branch
      %66 = sbr.rel (0) target = $region25
    $region24: #{tpu_custom_call.1} parent=1 // pred_region
      _
    $region25: #{tpu_custom_call.1} parent=1 // pred_fallthru
      _
    // Predicated region
    $region26: #{tpu_custom_call.1} parent=1 // pred_check
      _
    $region27: #{tpu_custom_call.1} parent=1 // pred_check_branch
      %68 = sbr.rel (0) target = $region29
    $region28: #{tpu_custom_call.1} parent=1 // pred_region
      _
    $region29: #{tpu_custom_call.1} parent=1 // pred_fallthru
      _
    // Predicated region
    $region30: #{tpu_custom_call.1} parent=1 // pred_check
      _
    $region31: #{tpu_custom_call.1} parent=1 // pred_check_branch
      %70 = sbr.rel (0) target = $region33
    $region32: #{tpu_custom_call.1} parent=1 // pred_region
      %72 = vsyncadd [#allocation10], 0
      %s73 = sshll.u32 %s7, 4
      %s74 = int_to_ptr.hbm [resolvable:$true] %s73
      %s75 = sshll.u32 [#allocation9], 4
      %s76 = int_to_ptr.vmem [resolvable:$true] %s75
      %81 = dma.hbm_to_vmem [thread:$0]  %s74, 512, %s76, [#allocation10], 128, 128, 8
    $region33: #{tpu_custom_call.1} parent=1 // pred_fallthru
      _
    // Predicated region
    $region34: #{tpu_custom_call.1} parent=1 // pred_check
      _
    $region35: #{tpu_custom_call.1} parent=1 // pred_check_branch
      %83 = sbr.rel (0) target = $region37
    $region36: #{tpu_custom_call.1} parent=1 // pred_region
      _
    $region37: #{tpu_custom_call.1} parent=1 // pred_fallthru
      _
    // Predicated region
    $region38: #{tpu_custom_call.1} parent=1 // pred_check
      _
    $region39: #{tpu_custom_call.1} parent=1 // pred_check_branch
      %85 = sbr.rel (0) target = $region41
    $region40: #{tpu_custom_call.1} parent=1 // pred_region
      _
    $region41: #{tpu_custom_call.1} parent=1 // pred_fallthru
      _
    // Predicated region
    $region42: #{tpu_custom_call.1} parent=1 // pred_check
      _
    $region43: #{tpu_custom_call.1} parent=1 // pred_check_branch
      %87 = sbr.rel (0) target = $region45
    $region44: #{tpu_custom_call.1} parent=1 // pred_region
      _
    $region45: #{tpu_custom_call.1} parent=1 // pred_fallthru
      _
    // Predicated region
    $region46: #{tpu_custom_call.1} parent=1 // pred_check
      _
    $region47: #{tpu_custom_call.1} parent=1 // pred_check_branch
      %89 = sbr.rel (0) target = $region49
    $region48: #{tpu_custom_call.1} parent=1 // pred_region
      %91 = vsyncadd [#allocation10], 0
      %s92 = sshll.u32 %s11, 4
      %s93 = int_to_ptr.hbm [resolvable:$true] %s92
      %s94 = sshll.u32 [#allocation11], 4
      %s95 = int_to_ptr.vmem [resolvable:$true] %s94
      %100 = dma.hbm_to_vmem [thread:$0]  %s93, 512, %s95, [#allocation10], 128, 128, 8
    $region49: #{tpu_custom_call.1} parent=1 // pred_fallthru
      _
    // Predicated region
    $region50: #{tpu_custom_call.1} parent=1 // pred_check
      _
    $region51: #{tpu_custom_call.1} parent=1 // pred_check_branch
      %102 = sbr.rel (0) target = $region53
    $region52: #{tpu_custom_call.1} parent=1 // pred_region
      %104 = dma.done [#allocation3], 128
    $region53: #{tpu_custom_call.1} parent=1 // pred_fallthru
      _
    // Predicated region
    $region54: #{tpu_custom_call.1} parent=1 // pred_check
      _
    $region55: #{tpu_custom_call.1} parent=1 // pred_check_branch
      %106 = sbr.rel (0) target = $region57
    $region56: #{tpu_custom_call.1} parent=1 // pred_region
      %108 = dma.done [#allocation7], 512
    $region57: #{tpu_custom_call.1} parent=1 // pred_fallthru
      _
    // Predicated region
    $region58: #{tpu_custom_call.1} parent=1 // pred_check
      _
    $region59: #{tpu_custom_call.1} parent=1 // pred_check_branch
      %110 = sbr.rel (0) target = $region61
    $region60: #{tpu_custom_call.1} parent=1 // pred_region
      %112 = dma.done [#allocation7], 512
    $region61: #{tpu_custom_call.1} parent=1 // pred_fallthru
      _
    // Predicated region
    $region62: #{tpu_custom_call.1} parent=1 // pred_check
      _
    $region63: #{tpu_custom_call.1} parent=1 // pred_check_branch
      %114 = sbr.rel (0) target = $region65
    $region64: #{tpu_custom_call.1} parent=1 // pred_region
      %116 = dma.done [#allocation10], 512
    $region65: #{tpu_custom_call.1} parent=1 // pred_fallthru
      _
    // Predicated region
    $region66: #{tpu_custom_call.1} parent=1 // pred_check
      _
    $region67: #{tpu_custom_call.1} parent=1 // pred_check_branch
      %118 = sbr.rel (0) target = $region69
    $region68: #{tpu_custom_call.1} parent=1 // pred_region
      %120 = dma.done [#allocation10], 512
    $region69: #{tpu_custom_call.1} parent=1 // pred_fallthru
      _
    %v121 = vld [vmem:[#allocation2] sm:$0xff]
    %v122 = vld [vmem:[#allocation6] sm:$0xff]
    %v123 = vld [vmem:[#allocation6 + $0x8] sm:$0xff]
    %v124 = vld [vmem:[#allocation6 + $0x10] sm:$0xff]
    %v125 = vld [vmem:[#allocation6 + $0x18] sm:$0xff]
    %v126 = vld [vmem:[%s2] sm:$0x1]
    %v128 = vperm.slane %v126, 0
    %vm130 = vcmask 261120
    %v132 = vsel %vm130, %v121, 0
    %134 = vmatpush.msra.mxu0 0.0
    %135 = vmatpush.msra.mxu0 0.0
    %136 = vmatpush.msra.mxu0 0.0
    %137 = vmatpush.msra.mxu0 0.0
    %138 = vmatpush.msra.mxu0 0.0
    %139 = vmatpush.msra.mxu0 0.0
    %140 = vmatpush.msra.mxu0 0.0
    %141 = vmatpush.msra.mxu0 0.0
    %142 = vmatpush.msra.mxu0 0.0
    %143 = vmatpush.msra.mxu0 0.0
    %144 = vmatpush.msra.mxu0 0.0
    %145 = vmatpush.msra.mxu0 0.0
    %146 = vmatpush.msra.mxu0 %v125
    %147 = vmatpush.msra.mxu0 %v124
    %148 = vmatpush.msra.mxu0 %v123
    %149 = vmatpush.msra.mxu0 %v122
    %150 = vmatmul.f32.gmra.mxu0 %v132
    %v151 = vpop.f32.mrf.mxu0
    %v152 = vadd.f32 %v128, %v151
    %153 = vdwg.mxu0
    %155 = vrot.lane.b32.xlu0 %v152, 96
    %v156 = vpop.permute.xlu0 %155
    %v157 = vsel %vm130, %v152, 0
    %v159 = vsel %vm130, %v156, 0
    %161 = vmatpush.xpose.msra.mxu0 0.0
    %162 = vmatpush.xpose.msra.mxu0 0.0
    %163 = vmatpush.xpose.msra.mxu0 0.0
    %164 = vmatpush.xpose.msra.mxu0 0.0
    %165 = vmatpush.xpose.msra.mxu0 0.0
    %166 = vmatpush.xpose.msra.mxu0 0.0
    %167 = vmatpush.xpose.msra.mxu0 0.0
    %168 = vmatpush.xpose.msra.mxu0 0.0
    %169 = vmatpush.xpose.msra.mxu0 0.0
    %170 = vmatpush.xpose.msra.mxu0 0.0
    %171 = vmatpush.xpose.msra.mxu0 0.0
    %172 = vmatpush.xpose.msra.mxu0 0.0
    %173 = vmatpush.xpose.msra.mxu0 0.0
    %174 = vmatpush.xpose.msra.mxu0 0.0
    %175 = vmatpush.xpose.msra.mxu0 0.0
    %176 = vmatpush.xpose.msra.mxu0 %v159
    %177 = vmatmul.f32.gmra.mxu0 %v157
    %v178 = vpop.f32.mrf.mxu0
    %v179 = vadd.f32 0.0, %v178
    %180 = vdwg.mxu0
    %v181 = vmul.f32 %v179, 0.17677669
    %vm182 = vcmask 64512
    %v183 = vsel %vm182, %v181, -inf
    %184 = vmax.xlane.f32.xlu0 %v183
    %v185 = vpop.xlane.xlu0 %184
    %v186 = vsub.f32 %v181, %v185
    %v187 = vmul.f32 %v186, 1.442695
    %v188 = vpow.pop %v187
    %v189 = vsel %vm182, %v188, 0.0
    %190 = vadd.xlane.f32.xlu0 %v189
    %v191 = vpop.xlane.xlu0 %190
    %v192 = vrcp.pop %v191
    %v193 = vmul.f32 %v188, %v192
    %194 = vrot.lane.b32.xlu0 %v152, 64
    %v195 = vpop.permute.xlu0 %194
    %v198 = vsel %vm182, %v193, 0
    %200 = vmatpush.msra.mxu0 0.0
    %201 = vmatpush.msra.mxu0 0.0
    %202 = vmatpush.msra.mxu0 0.0
    %203 = vmatpush.msra.mxu0 0.0
    %204 = vmatpush.msra.mxu0 0.0
    %205 = vmatpush.msra.mxu0 0.0
    %206 = vmatpush.msra.mxu0 0.0
    %207 = vmatpush.msra.mxu0 0.0
    %208 = vmatpush.msra.mxu0 0.0
    %209 = vmatpush.msra.mxu0 0.0
    %210 = vmatpush.msra.mxu0 0.0
    %211 = vmatpush.msra.mxu0 0.0
    %212 = vmatpush.msra.mxu0 0.0
    %213 = vmatpush.msra.mxu0 0.0
    %214 = vmatpush.msra.mxu0 0.0
    %215 = vmatpush.msra.mxu0 %v195
    %216 = vmatmul.f32.gmra.mxu0 %v198
    %v217 = vpop.f32.mrf.mxu0
    %v218 = vadd.f32 0.0, %v217
    %219 = vdwg.mxu0
    %v220 = vld [vmem:[#allocation8] sm:$0xff]
    %v221 = vld [vmem:[#allocation8 + $0x8] sm:$0xff]
    %v222 = vld [vmem:[#allocation8 + $0x10] sm:$0xff]
    %v223 = vld [vmem:[#allocation8 + $0x18] sm:$0xff]
    %v224 = vld [vmem:[%s4] sm:$0x1]
    %v225 = vld [vmem:[%s5] sm:$0x1]
    %v226 = vld [vmem:[%s6] sm:$0x1]
    %v228 = vperm.slane %v224, 0
    %230 = vmatpush.msra.mxu0 0.0
    %231 = vmatpush.msra.mxu0 0.0
    %232 = vmatpush.msra.mxu0 0.0
    %233 = vmatpush.msra.mxu0 0.0
    %234 = vmatpush.msra.mxu0 0.0
    %235 = vmatpush.msra.mxu0 0.0
    %236 = vmatpush.msra.mxu0 0.0
    %237 = vmatpush.msra.mxu0 0.0
    %238 = vmatpush.msra.mxu0 0.0
    %239 = vmatpush.msra.mxu0 0.0
    %240 = vmatpush.msra.mxu0 0.0
    %241 = vmatpush.msra.mxu0 0.0
    %242 = vmatpush.msra.mxu0 %v223
    %243 = vmatpush.msra.mxu0 %v222
    %244 = vmatpush.msra.mxu0 %v221
    %245 = vmatpush.msra.mxu0 %v220
    %246 = vmatmul.f32.gmra.mxu0 %v132
    %v247 = vpop.f32.mrf.mxu0
    %v248 = vadd.f32 %v228, %v247
    %249 = vdwg.mxu0
    %v250 = vsel %vm130, %v248, 0.0
    %251 = vadd.xlane.f32.xlu0 %v250
    %v252 = vpop.xlane.xlu0 %251
    %v253 = vrcp.pop 32.0
    %v254 = vmul.f32 32.0, %v253
    %v255 = vsub.f32 1.0, %v254
    %v256 = vmul.f32 %v253, %v255
    %v257 = vadd.f32 %v253, %v256
    %vm258 = vweird.f32 %v253
    %v259 = vsel %vm258, %v253, %v257
    %v260 = vmul.f32 %v252, %v259
    %v261 = vsub.f32 %v248, %v260
    %v262 = vmul.f32 %v261, %v261
    %v263 = vsel %vm130, %v262, 0.0
    %264 = vadd.xlane.f32.xlu0 %v263
    %v265 = vpop.xlane.xlu0 %264
    %v266 = vmul.f32 %v265, %v259
    %v267 = vadd.f32 %v266, 1e-05
    %v268 = vrsqrt.pop %v267
    %v269 = vmul.f32 %v268, %v267
    %v270 = vmul.f32 %v269, %v268
    %v271 = vmul.f32 0.5, %v270
    %v272 = vsub.f32 1.5, %v271
    %v273 = vmul.f32 %v268, %v272
    %vm274 = vweird.f32 %v267
    %vm275 = vweird.f32 %v268
    %vm276 = vmor %vm274, %vm275
    %v277 = vsel %vm276, %v268, %v273
    %v278 = vmul.f32 %v261, %v277
    %v280 = vperm.slane %v225, 0
    %v282 = vmul.f32 %v278, %v280
    %v284 = vperm.slane %v226, 0
    %v286 = vadd.f32 %v282, %v284
    %vm287 = vcmp.ge.f32.partialorder %v286, 0.0
    %v288 = vmul.f32 %v286, 0.01
    %v289 = vsel %vm287, %v286, %v288
    %v290 = vadd.f32 %v289, %v218
    %v291 = vld [vmem:[#allocation9] sm:$0xff]
    %v292 = vld [vmem:[#allocation9 + $0x8] sm:$0xff]
    %v293 = vld [vmem:[#allocation9 + $0x10] sm:$0xff]
    %v294 = vld [vmem:[#allocation9 + $0x18] sm:$0xff]
    %v295 = vld [vmem:[%s8] sm:$0x1]
    %v296 = vld [vmem:[%s9] sm:$0x1]
    %v297 = vld [vmem:[%s10] sm:$0x1]
    %v299 = vperm.slane %v295, 0
    %v302 = vsel %vm130, %v290, 0
    %304 = vmatpush.msra.mxu0 0.0
    %305 = vmatpush.msra.mxu0 0.0
    %306 = vmatpush.msra.mxu0 0.0
    %307 = vmatpush.msra.mxu0 0.0
    %308 = vmatpush.msra.mxu0 0.0
    %309 = vmatpush.msra.mxu0 0.0
    %310 = vmatpush.msra.mxu0 0.0
    %311 = vmatpush.msra.mxu0 0.0
    %312 = vmatpush.msra.mxu0 0.0
    %313 = vmatpush.msra.mxu0 0.0
    %314 = vmatpush.msra.mxu0 0.0
    %315 = vmatpush.msra.mxu0 0.0
    %316 = vmatpush.msra.mxu0 %v294
    %317 = vmatpush.msra.mxu0 %v293
    %318 = vmatpush.msra.mxu0 %v292
    %319 = vmatpush.msra.mxu0 %v291
    %320 = vmatmul.f32.gmra.mxu0 %v302
    %v321 = vpop.f32.mrf.mxu0
    %v322 = vadd.f32 %v299, %v321
    %323 = vdwg.mxu0
    %v324 = vsel %vm130, %v322, 0.0
    %325 = vadd.xlane.f32.xlu0 %v324
    %v326 = vpop.xlane.xlu0 %325
    %v327 = vmul.f32 %v326, %v259
    %v328 = vsub.f32 %v322, %v327
    %v329 = vmul.f32 %v328, %v328
    %v330 = vsel %vm130, %v329, 0.0
    %331 = vadd.xlane.f32.xlu0 %v330
    %v332 = vpop.xlane.xlu0 %331
    %v333 = vmul.f32 %v332, %v259
    %v334 = vadd.f32 %v333, 1e-05
    %v335 = vrsqrt.pop %v334
    %v336 = vmul.f32 %v335, %v334
    %v337 = vmul.f32 %v336, %v335
    %v338 = vmul.f32 0.5, %v337
    %v339 = vsub.f32 1.5, %v338
    %v340 = vmul.f32 %v335, %v339
    %vm341 = vweird.f32 %v334
    %vm342 = vweird.f32 %v335
    %vm343 = vmor %vm341, %vm342
    %v344 = vsel %vm343, %v335, %v340
    %v345 = vmul.f32 %v328, %v344
    %v347 = vperm.slane %v296, 0
    %v349 = vmul.f32 %v345, %v347
    %v351 = vperm.slane %v297, 0
    %v353 = vadd.f32 %v349, %v351
    %vm354 = vcmp.ge.f32.partialorder %v353, 0.0
    %v355 = vmul.f32 %v353, 0.01
    %v356 = vsel %vm354, %v353, %v355
    %v357 = vadd.f32 %v356, %v218
    %v358 = vld [vmem:[#allocation11] sm:$0xff]
    %v359 = vld [vmem:[#allocation11 + $0x8] sm:$0xff]
    %v360 = vld [vmem:[#allocation11 + $0x10] sm:$0xff]
    %v361 = vld [vmem:[#allocation11 + $0x18] sm:$0xff]
    %v363 = vsel %vm130, %v357, 0
    %365 = vmatpush.msra.mxu0 0.0
    %366 = vmatpush.msra.mxu0 0.0
    %367 = vmatpush.msra.mxu0 0.0
    %368 = vmatpush.msra.mxu0 0.0
    %369 = vmatpush.msra.mxu0 0.0
    %370 = vmatpush.msra.mxu0 0.0
    %371 = vmatpush.msra.mxu0 0.0
    %372 = vmatpush.msra.mxu0 0.0
    %373 = vmatpush.msra.mxu0 0.0
    %374 = vmatpush.msra.mxu0 0.0
    %375 = vmatpush.msra.mxu0 0.0
    %376 = vmatpush.msra.mxu0 0.0
    %377 = vmatpush.msra.mxu0 %v361
    %378 = vmatpush.msra.mxu0 %v360
    %379 = vmatpush.msra.mxu0 %v359
    %380 = vmatpush.msra.mxu0 %v358
    %381 = vmatmul.f32.gmra.mxu0 %v363
    %v382 = vpop.f32.mrf.mxu0
    %v383 = vadd.f32 0.0, %v382
    %384 = vdwg.mxu0
    %385 = vst.msk [vmem:[#allocation12] sm:$0xff] %vm130, %v383
    %v386 = vadd.f32 %v383, 1.0
    %v387 = vmul.f32 %v383, %v383
    %389 = vrot.lane.b32.xlu0 %v387, 16
    %v390 = vpop.permute.xlu0 %389
    %v392 = vsub.f32 %v386, %v390
    %v393 = vmul.f32 %v383, 1.442695
    %v394 = vpow.pop %v393
    %v395 = vsub.f32 %v392, %v394
    %397 = vrot.lane.b32.xlu0 %v395, 112
    %v398 = vpop.permute.xlu0 %397
    %vm400 = vcmask 130048
    %v401 = vsel %vm400, %v398, 0.0
    %402 = vadd.xlane.f32.xlu0 %v401
    %v403 = vpop.xlane.xlu0 %402
    %v404 = vmul.f32 %v403, -0.5
    %vm405 = vcmask 7168
    %v406 = vsel %vm405, %v404, 0.0
    %407 = vadd.xlane.f32.xlu0 %v406
    %v408 = vpop.xlane.xlu0 %407
    %v409 = vrot.slane %v408, 4
    %v410 = vadd.f32 %v408, %v409
    %v411 = vrot.slane %v410, 2
    %v412 = vadd.f32 %v410, %v411
    %v413 = vrot.slane %v412, 1
    %v414 = vadd.f32 %v412, %v413
    %s415 = vtos %v414
    %v416 = vrcp.pop 8.0
    %v417 = vmul.f32 8.0, %v416
    %v418 = vsub.f32 1.0, %v417
    %v419 = vmul.f32 %v416, %v418
    %v420 = vadd.f32 %v416, %v419
    %vm421 = vweird.f32 %v416
    %v422 = vsel %vm421, %v416, %v420
    %s423 = vtos %v422
    %s424 = smul.f32 %s415, %s423
    %s425 = scalar_lea.smem [#allocation13], 0
    %426 = sst [smem:[%s425]] %s424
    // Predicated region
    $region70: #{tpu_custom_call.1} parent=1 // pred_check
      _
    $region71: #{tpu_custom_call.1} parent=1 // pred_check_branch
      %428 = sbr.rel (0) target = $region73
    $region72: #{tpu_custom_call.1} parent=1 // pred_region
      %430 = vsyncadd [#allocation4], 0
      %s432 = sshll.u32 [#allocation12], 4
      %s433 = int_to_ptr.vmem [resolvable:$true] %s432
      %s434 = sshll.u32 %s12, 4
      %s435 = int_to_ptr.hbm [resolvable:$true] %s434
      %437 = dma.vmem_to_hbm [thread:$0]  %s433, 128, %s435, [#allocation4]
    $region73: #{tpu_custom_call.1} parent=1 // pred_fallthru
      _
    // Predicated region
    $region74: #{tpu_custom_call.1} parent=1 // pred_check
      _
    $region75: #{tpu_custom_call.1} parent=1 // pred_check_branch
      %439 = sbr.rel (0) target = $region77
    $region76: #{tpu_custom_call.1} parent=1 // pred_region
      %441 = vsyncadd [#allocation5], 0
      %s443 = sshll.u32 %s13, 4
      %s444 = int_to_ptr.hbm [resolvable:$true] %s443
      %446 = dma.smem_to_hbm [#allocation13], 16, %s444, [#allocation5]
    $region77: #{tpu_custom_call.1} parent=1 // pred_fallthru
      _
    // Predicated region
    $region78: #{tpu_custom_call.1} parent=1 // pred_check
      _
    $region79: #{tpu_custom_call.1} parent=1 // pred_check_branch
      %448 = sbr.rel (0) target = $region81
    $region80: #{tpu_custom_call.1} parent=1 // pred_region
      %450 = dma.done [#allocation4], 128
    $region81: #{tpu_custom_call.1} parent=1 // pred_fallthru
      _
    // Predicated region
    $region82: #{tpu_custom_call.1} parent=1 // pred_check
      _
    $region83: #{tpu_custom_call.1} parent=1 // pred_check_branch
      %452 = sbr.rel (0) target = $region85
    $region84: #{tpu_custom_call.1} parent=1 // pred_region
      %454 = dma.done [#allocation5], 16
    $region85: #{tpu_custom_call.1} parent=1 // pred_fallthru
      _
    %455 = sfence
    %456 = vsyncpa [#allocation3], 1
    %457 = vsyncpa [#allocation7], 1
    %458 = vsyncpa [#allocation10], 1
    %459 = vsyncpa [#allocation4], 1
    %460 = vsyncpa [#allocation5], 1

</llo_original>
